<compile_context>
chip_gen: v6e
topology: v6e:2x2x1
jax: 0.10.0
libtpu: 0.0.40
codegen_flags: <defaults>
</compile_context>

<pallas_src>
import functools

import jax
import jax.numpy as jnp
import numpy as np
from jax.experimental import pallas as pl
from jax.experimental.pallas import tpu as pltpu


# ---------------------------------------------------------------------------
# Deterministic "parameter" setup: the smooth-label table from __init__.
# ---------------------------------------------------------------------------
def compute_smooth_labels(num_classes: int = 4, alpha: float = 1.1) -> np.ndarray:
    rows = []
    indices = np.arange(num_classes)
    for target in range(num_classes):
        distances = np.abs(indices - target).astype(np.float32)
        same_group = ((target < 2) & (indices < 2)) | ((target >= 2) & (indices >= 2))
        distances = np.where(same_group, distances, distances * alpha)
        exp_d = np.exp(-distances)
        rows.append(exp_d / exp_d.sum())
    return np.stack(rows).astype(np.float32)  # [C, C]


def _round_up(x: int, m: int) -> int:
    return (x + m - 1) // m * m


# ---------------------------------------------------------------------------
# Pallas kernel: one batch tile (tile_rows x 128 samples) per grid step.
#   logits_ref: [C, tile_rows, 128] (input dtype)   labels_ref: [tile_rows, 128] i32
#   out_ref   : [1, 128] f32  (per-lane partial sums, already scaled by 1/B)
# `table` is a tuple-of-tuples of python floats (compile-time constants);
# `inv_batch` is a trace-time python float.
# ---------------------------------------------------------------------------
def _smooth_loss_kernel(table, inv_batch, logits_ref, labels_ref, out_ref):
    num_classes = logits_ref.shape[0]
    labels = labels_ref[...]                                        # [R, 128] i32

    # Per-class rows, unrolled (C is tiny).  Cast to f32 in-kernel so bf16
    # inputs only cost half the HBM bytes (and stay correct on v5e).
    rows = [logits_ref[c, :, :].astype(jnp.float32) for c in range(num_classes)]

    # Exact log-sum-exp over classes (VPU max/sub/add + EUP exp, one log).
    m = rows[0]
    for c in range(1, num_classes):
        m = jnp.maximum(m, rows[c])
    s = jnp.exp(rows[0] - m)
    for c in range(1, num_classes):
        s = s + jnp.exp(rows[c] - m)
    lse = m + jnp.log(s)                                            # [R, 128]

    # Per-sample smooth coefficients w_c via a shared (C-1)-compare
    # nested-select chain on constant table entries, then one C-term dot.
    is_k = [labels == k for k in range(num_classes - 1)]            # shared cmps
    dot = jnp.zeros_like(lse)
    for c in range(num_classes):
        w = jnp.float32(table[num_classes - 1][c])
        for k in range(num_classes - 2, -1, -1):
            w = jnp.where(is_k[k], jnp.float32(table[k][c]), w)
        dot = dot + w * rows[c]

    # Since sum_c smooth_c == 1:  CE = lse - sum_c smooth_c * logit_c.
    per_sample = jnp.where(labels >= 0, lse - dot, 0.0)             # mask padding

    # Per-lane partial sums (sublane reduce only); fold in 1/batch here.
    out_ref[...] = jnp.sum(per_sample, axis=0, keepdims=True) * jnp.float32(inv_batch)


# ---------------------------------------------------------------------------
# Wrapper
# ---------------------------------------------------------------------------
@functools.partial(jax.jit, static_argnames=("alpha", "max_tile_rows"))
def smooth_loss(y_pred: jax.Array, y_true: jax.Array, *,
                alpha: float = 1.1, max_tile_rows: int = 256) -> jax.Array:
    """y_pred: [B, C] float (f32 or bf16), y_true: [B] int -> scalar mean loss."""
    if max_tile_rows < 8 or max_tile_rows % 8 != 0:
        raise ValueError("max_tile_rows must be a positive multiple of 8")
    batch, num_classes = y_pred.shape

    # Compile-time smooth-label table (deterministic from num_classes/alpha).
    table_np = compute_smooth_labels(num_classes, alpha)
    table = tuple(tuple(float(v) for v in row) for row in table_np)

    # ---- Tiling: batch -> (rows, 128) lanes ------------------------------
    total_rows = _round_up(batch, 128) // 128
    if total_rows <= 16:
        # Tiny batch: single tile; block rows dim equals the full array dim,
        # so it need not be a multiple of 8.
        tile_rows = total_rows
    else:
        # Large batch: at least 2 "parallel" tiles (v7x dual TensorCore),
        # each at most max_tile_rows (default 256 rows = 32K samples).
        tile_rows = min(max_tile_rows, _round_up(pl.cdiv(total_rows, 2), 8))
    rows_pad = _round_up(total_rows, tile_rows)
    num_tiles = rows_pad // tile_rows
    b_pad = rows_pad * 128

    # ---- Layout plumbing: fused pad + transpose + reshape ----------------
    # TODO(synk): emit class-major logits upstream (fuse into the producing
    # matmul's output layout) to drop this transpose pass entirely.
    logits = y_pred                                   # keep input dtype (bf16 OK)
    labels = y_true.astype(jnp.int32)
    if b_pad != batch:
        logits = jnp.pad(logits, ((0, b_pad - batch), (0, 0)))
        labels = jnp.pad(labels, (0, b_pad - batch), constant_values=-1)
    logits_t = jnp.transpose(logits).reshape(num_classes, rows_pad, 128)
    labels2d = labels.reshape(rows_pad, 128)

    kernel = functools.partial(_smooth_loss_kernel, table, 1.0 / float(batch))

    itemsize = jnp.dtype(y_pred.dtype).itemsize
    cost = pl.CostEstimate(
        flops=45 * b_pad,
        transcendentals=(num_classes + 1) * b_pad,
        bytes_accessed=b_pad * (num_classes * itemsize + 4) + num_tiles * 128 * 4,
    )

    partials = pl.pallas_call(
        kernel,
        out_shape=jax.ShapeDtypeStruct((num_tiles, 128), jnp.float32),
        grid_spec=pltpu.PrefetchScalarGridSpec(
            num_scalar_prefetch=0,
            grid=(num_tiles,),
            in_specs=[
                pl.BlockSpec((num_classes, tile_rows, 128), lambda i: (0, i, 0)),
                pl.BlockSpec((tile_rows, 128), lambda i: (i, 0)),
            ],
            out_specs=pl.BlockSpec((1, 128), lambda i: (i, 0)),
        ),
        compiler_params=pltpu.CompilerParams(
            # Independent per-tile partials -> safe to shard across v7x's 2 TCs.
            dimension_semantics=("parallel",),
        ),
        cost_estimate=cost,
    )(logits_t, labels2d)

    # 1/batch already folded in-kernel; just sum the per-lane partials.
    return jnp.sum(partials)


# ---------------------------------------------------------------------------
# Pure-JAX reference (mirrors the PyTorch forward: softmax + log(p + 1e-10)).
# The kernel's exact LSE form differs only by O(1e-7) for well-behaved logits.
# ---------------------------------------------------------------------------
def smooth_loss_ref(y_pred, y_true, table):
    smooth = table[y_true.astype(jnp.int32)]
    p = jax.nn.softmax(y_pred.astype(jnp.float32), axis=-1)
    loss = -jnp.sum(smooth * jnp.log(p + 1e-10), axis=1)
    return jnp.mean(loss)


if __name__ == "__main__":
    num_classes = 4
    table_j = jnp.asarray(compute_smooth_labels(num_classes, alpha=1.1))

    key = jax.random.PRNGKey(0)
    k1, k2, k3, k4, k5, k6 = jax.random.split(key, 6)

    # Small case matching typical module use (single tile, batch padded to 128).
    y_pred = jax.random.normal(k1, (8, num_classes), dtype=jnp.float32)
    y_true = jax.random.randint(k2, (8,), 0, num_classes, dtype=jnp.int32)
    loss = smooth_loss(y_pred, y_true)
    jax.block_until_ready(loss)
    ref = smooth_loss_ref(y_pred, y_true, table_j)
    assert jnp.allclose(loss, ref, atol=1e-5, rtol=1e-5), (loss, ref)

    # Batch = 640 (5 lane rows, still a single tile).
    y_pred2 = jax.random.normal(k3, (640, num_classes), dtype=jnp.float32)
    y_true2 = jax.random.randint(k4, (640,), 0, num_classes, dtype=jnp.int32)
    loss2 = smooth_loss(y_pred2, y_true2)
    jax.block_until_ready(loss2)
    ref2 = smooth_loss_ref(y_pred2, y_true2, table_j)
    assert jnp.allclose(loss2, ref2, atol=1e-5, rtol=1e-5), (loss2, ref2)

    # Batch = 2560 bf16 logits: 20 lane rows -> 2 "parallel" tiles of 16 rows
    # (exercises the multi-tile grid, row padding, and the in-kernel bf16 cast).
    y_pred3 = jax.random.normal(k5, (2560, num_classes), dtype=jnp.bfloat16)
    y_true3 = jax.random.randint(k6, (2560,), 0, num_classes, dtype=jnp.int32)
    loss3 = smooth_loss(y_pred3, y_true3)
    jax.block_until_ready(loss3)
    ref3 = smooth_loss_ref(y_pred3, y_true3, table_j)
    assert jnp.allclose(loss3, ref3, atol=1e-5, rtol=1e-5), (loss3, ref3)

    print("KERNEL_OK")
</pallas_src>

<mosaic_0001>
module attributes {stable_mosaic.version = 11 : i64} {
  func.func @_smooth_loss_kernel(%arg0: i32, %arg1: memref<4x1x128xf32, #tpu.memory_space<vmem>>, %arg2: memref<1x128xi32, #tpu.memory_space<vmem>>, %arg3: memref<1x128xf32, #tpu.memory_space<vmem>>) attributes {dimension_semantics = [#tpu.dimension_semantics<parallel>], iteration_bounds = array<i64: 1>, scalar_prefetch = 0 : i64, scratch_operands = 0 : i64, tpu.core_type = #tpu.core_type<tc>, window_params = [{transform_indices = @transform_0, window_bounds = array<i64: 4, 1, 128>}, {transform_indices = @transform_1, window_bounds = array<i64: 1, 128>}, {transform_indices = @transform_2, window_bounds = array<i64: 1, 128>}]} {
    %c0 = arith.constant 0 : index
    %c0_0 = arith.constant 0 : index
    %0 = vector.load %arg2[%c0, %c0_0] : memref<1x128xi32, #tpu.memory_space<vmem>>, vector<1x128xi32>
    %c0_1 = arith.constant 0 : index
    %c0_2 = arith.constant 0 : index
    %c0_3 = arith.constant 0 : index
    %1 = vector.load %arg1[%c0_1, %c0_2, %c0_3] : memref<4x1x128xf32, #tpu.memory_space<vmem>>, vector<1x1x128xf32>
    %2 = vector.shape_cast %1 : vector<1x1x128xf32> to vector<1x128xf32>
    %c1 = arith.constant 1 : index
    %c0_4 = arith.constant 0 : index
    %c0_5 = arith.constant 0 : index
    %3 = vector.load %arg1[%c1, %c0_4, %c0_5] : memref<4x1x128xf32, #tpu.memory_space<vmem>>, vector<1x1x128xf32>
    %4 = vector.shape_cast %3 : vector<1x1x128xf32> to vector<1x128xf32>
    %c2 = arith.constant 2 : index
    %c0_6 = arith.constant 0 : index
    %c0_7 = arith.constant 0 : index
    %5 = vector.load %arg1[%c2, %c0_6, %c0_7] : memref<4x1x128xf32, #tpu.memory_space<vmem>>, vector<1x1x128xf32>
    %6 = vector.shape_cast %5 : vector<1x1x128xf32> to vector<1x128xf32>
    %c3 = arith.constant 3 : index
    %c0_8 = arith.constant 0 : index
    %c0_9 = arith.constant 0 : index
    %7 = vector.load %arg1[%c3, %c0_8, %c0_9] : memref<4x1x128xf32, #tpu.memory_space<vmem>>, vector<1x1x128xf32>
    %8 = vector.shape_cast %7 : vector<1x1x128xf32> to vector<1x128xf32>
    %9 = arith.maximumf %2, %4 : vector<1x128xf32>
    %10 = arith.maximumf %9, %6 : vector<1x128xf32>
    %11 = arith.maximumf %10, %8 : vector<1x128xf32>
    %12 = arith.subf %2, %11 : vector<1x128xf32>
    %13 = math.exp %12 : vector<1x128xf32>
    %14 = arith.subf %4, %11 : vector<1x128xf32>
    %15 = math.exp %14 : vector<1x128xf32>
    %16 = arith.addf %13, %15 : vector<1x128xf32>
    %17 = arith.subf %6, %11 : vector<1x128xf32>
    %18 = math.exp %17 : vector<1x128xf32>
    %19 = arith.addf %16, %18 : vector<1x128xf32>
    %20 = arith.subf %8, %11 : vector<1x128xf32>
    %21 = math.exp %20 : vector<1x128xf32>
    %22 = arith.addf %19, %21 : vector<1x128xf32>
    %23 = math.log %22 : vector<1x128xf32>
    %24 = arith.addf %11, %23 : vector<1x128xf32>
    %c0_i32 = arith.constant 0 : i32
    %25 = vector.broadcast %c0_i32 : i32 to vector<1x128xi32>
    %26 = arith.cmpi eq, %0, %25 : vector<1x128xi32>
    %c1_i32 = arith.constant 1 : i32
    %27 = vector.broadcast %c1_i32 : i32 to vector<1x128xi32>
    %28 = arith.cmpi eq, %0, %27 : vector<1x128xi32>
    %c2_i32 = arith.constant 2 : i32
    %29 = vector.broadcast %c2_i32 : i32 to vector<1x128xi32>
    %30 = arith.cmpi eq, %0, %29 : vector<1x128xi32>
    %cst = arith.constant 0.000000e+00 : f32
    %31 = vector.broadcast %cst : f32 to vector<1x128xf32>
    %cst_10 = arith.constant 0.0611647144 : f32
    %cst_11 = arith.constant 0.0243362319 : f32
    %32 = vector.broadcast %cst_10 : f32 to vector<1x128xf32>
    %33 = vector.broadcast %cst_11 : f32 to vector<1x128xf32>
    %34 = arith.select %30, %32, %33 : vector<1x128xi1>, vector<1x128xf32>
    %cst_12 = arith.constant 2.030740e-01 : f32
    %35 = vector.broadcast %cst_12 : f32 to vector<1x128xf32>
    %36 = arith.select %28, %35, %34 : vector<1x128xi1>, vector<1x128xf32>
    %cst_13 = arith.constant 0.659819662 : f32
    %37 = vector.broadcast %cst_13 : f32 to vector<1x128xf32>
    %38 = arith.select %26, %37, %36 : vector<1x128xi1>, vector<1x128xf32>
    %39 = arith.mulf %38, %2 : vector<1x128xf32>
    %40 = arith.addf %31, %39 : vector<1x128xf32>
    %cst_14 = arith.constant 0.183748931 : f32
    %cst_15 = arith.constant 0.0731100962 : f32
    %41 = vector.broadcast %cst_14 : f32 to vector<1x128xf32>
    %42 = vector.broadcast %cst_15 : f32 to vector<1x128xf32>
    %43 = arith.select %30, %41, %42 : vector<1x128xi1>, vector<1x128xf32>
    %cst_16 = arith.constant 0.552012384 : f32
    %44 = vector.broadcast %cst_16 : f32 to vector<1x128xf32>
    %45 = arith.select %28, %44, %43 : vector<1x128xi1>, vector<1x128xf32>
    %cst_17 = arith.constant 0.242734075 : f32
    %46 = vector.broadcast %cst_17 : f32 to vector<1x128xf32>
    %47 = arith.select %26, %46, %45 : vector<1x128xi1>, vector<1x128xf32>
    %48 = arith.mulf %47, %4 : vector<1x128xf32>
    %49 = arith.addf %40, %48 : vector<1x128xf32>
    %cst_18 = arith.constant 0.552012384 : f32
    %cst_19 = arith.constant 0.24273406 : f32
    %50 = vector.broadcast %cst_18 : f32 to vector<1x128xf32>
    %51 = vector.broadcast %cst_19 : f32 to vector<1x128xf32>
    %52 = arith.select %30, %50, %51 : vector<1x128xi1>, vector<1x128xf32>
    %cst_20 = arith.constant 0.183748931 : f32
    %53 = vector.broadcast %cst_20 : f32 to vector<1x128xf32>
    %54 = arith.select %28, %53, %52 : vector<1x128xi1>, vector<1x128xf32>
    %cst_21 = arith.constant 7.311010e-02 : f32
    %55 = vector.broadcast %cst_21 : f32 to vector<1x128xf32>
    %56 = arith.select %26, %55, %54 : vector<1x128xi1>, vector<1x128xf32>
    %57 = arith.mulf %56, %6 : vector<1x128xf32>
    %58 = arith.addf %49, %57 : vector<1x128xf32>
    %cst_22 = arith.constant 2.030740e-01 : f32
    %cst_23 = arith.constant 0.659819603 : f32
    %59 = vector.broadcast %cst_22 : f32 to vector<1x128xf32>
    %60 = vector.broadcast %cst_23 : f32 to vector<1x128xf32>
    %61 = arith.select %30, %59, %60 : vector<1x128xi1>, vector<1x128xf32>
    %cst_24 = arith.constant 0.0611647144 : f32
    %62 = vector.broadcast %cst_24 : f32 to vector<1x128xf32>
    %63 = arith.select %28, %62, %61 : vector<1x128xi1>, vector<1x128xf32>
    %cst_25 = arith.constant 0.0243362337 : f32
    %64 = vector.broadcast %cst_25 : f32 to vector<1x128xf32>
    %65 = arith.select %26, %64, %63 : vector<1x128xi1>, vector<1x128xf32>
    %66 = arith.mulf %65, %8 : vector<1x128xf32>
    %67 = arith.addf %58, %66 : vector<1x128xf32>
    %c0_i32_26 = arith.constant 0 : i32
    %68 = vector.broadcast %c0_i32_26 : i32 to vector<1x128xi32>
    %69 = arith.cmpi sge, %0, %68 : vector<1x128xi32>
    %70 = arith.subf %24, %67 : vector<1x128xf32>
    %cst_27 = arith.constant 0.000000e+00 : f32
    %71 = vector.broadcast %cst_27 : f32 to vector<1x128xf32>
    %72 = arith.select %69, %70, %71 : vector<1x128xi1>, vector<1x128xf32>
    %cst_28 = arith.constant dense<0.000000e+00> : vector<128xf32>
    %73 = vector.multi_reduction <add>, %72, %cst_28 [0] : vector<1x128xf32> to vector<128xf32>
    %74 = vector.shape_cast %73 : vector<128xf32> to vector<1x128xf32>
    %cst_29 = arith.constant 1.250000e-01 : f32
    %75 = vector.broadcast %cst_29 : f32 to vector<1x128xf32>
    %76 = arith.mulf %74, %75 : vector<1x128xf32>
    %c0_30 = arith.constant 0 : index
    %c0_31 = arith.constant 0 : index
    %77 = vector.load %arg3[%c0_30, %c0_31] : memref<1x128xf32, #tpu.memory_space<vmem>>, vector<1x128xf32>
    tpu.vector_store %arg3[%c0_30, %c0_31], %76 {strides = array<i32>} : memref<1x128xf32, #tpu.memory_space<vmem>>, vector<1x128xf32>,
    return
  }
  func.func @transform_0(%arg0: i32) -> (i32, i32, i32) {
    %c0_i32 = arith.constant 0 : i32
    %c0_i32_0 = arith.constant 0 : i32
    %c0_i32_1 = arith.constant 0 : i32
    return %c0_i32, %arg0, %c0_i32_0 : i32, i32, i32
  }
  func.func @transform_1(%arg0: i32) -> (i32, i32) {
    %c0_i32 = arith.constant 0 : i32
    %c0_i32_0 = arith.constant 0 : i32
    return %arg0, %c0_i32 : i32, i32
  }
  func.func @transform_2(%arg0: i32) -> (i32, i32) {
    %c0_i32 = arith.constant 0 : i32
    %c0_i32_0 = arith.constant 0 : i32
    return %arg0, %c0_i32 : i32, i32
  }
}

</mosaic_0001>

<llo_original>
// kernel: smooth_loss.1
$region0: #{smooth_loss.1}
  #allocation0 [shape = 'u32[]', space=smem, size = 0x4, offset = 0x4, fixed_abs, tag = 'smem constant byte address 0x4 - core index']
  #allocation1 [shape = 'u32[144,128]{1,0:T(1,128)}', space=vmem, size = 0x12000, scoped, tag = 'internal scratch']
  %s0 = inlined_call_operand.vmem [shape: f32[4,1,128], index: 0, kind: input, shape index: {}]
  %s1 = inlined_call_operand.vmem [shape: s32[1,128], index: 1, kind: input, shape index: {}]
  %s2 = inlined_call_operand.vmem [shape: f32[1,128], index: 2, kind: output, shape index: {}]
  %s3 = sld [smem:[#allocation0]]
  $region18: #{smooth_loss.1} parent=0
    _
  %s5 = ssub.s32 1, %s3
  %s6 = scalar_select 0, %s5, %s3
  // Predicated region
  $region2: #{smooth_loss.1} parent=0 // pred_check
    _
  $region3: #{smooth_loss.1} parent=0 // pred_check_branch
    %8 = sbr.rel (0) target = $region5
  $region4: #{smooth_loss.1} parent=0 // pred_region
    _
  $region5: #{smooth_loss.1} parent=0 // pred_fallthru
    _
  // Predicated region
  $region6: #{smooth_loss.1} parent=0 // pred_check
    _
  $region7: #{smooth_loss.1} parent=0 // pred_check_branch
    %10 = sbr.rel (0) target = $region9
  $region8: #{smooth_loss.1} parent=0 // pred_region
    _
  $region9: #{smooth_loss.1} parent=0 // pred_fallthru
    _
  %v11 = vld [vmem:[%s1] sm:$0x1]
  %v12 = vld [vmem:[%s0] sm:$0x1]
  %s13 = scalar_lea.vmem %s0, 1
  %v14 = vld [vmem:[%s13] sm:$0x1]
  %s15 = scalar_lea.vmem %s0, 2
  %v16 = vld [vmem:[%s15] sm:$0x1]
  %s17 = scalar_lea.vmem %s0, 3
  %v18 = vld [vmem:[%s17] sm:$0x1]
  %v19 = vmax.f32 %v12, %v14
  %v20 = vmax.f32 %v19, %v16
  %v21 = vmax.f32 %v20, %v18
  %v22 = vsub.f32 %v12, %v21
  %v23 = vmul.f32 %v22, 1.442695
  %v24 = vpow.pop %v23
  %v25 = vsub.f32 %v14, %v21
  %v26 = vmul.f32 %v25, 1.442695
  %v27 = vpow.pop %v26
  %v28 = vadd.f32 %v24, %v27
  %v29 = vsub.f32 %v16, %v21
  %v30 = vmul.f32 %v29, 1.442695
  %v31 = vpow.pop %v30
  %v32 = vadd.f32 %v28, %v31
  %v33 = vsub.f32 %v18, %v21
  %v34 = vmul.f32 %v33, 1.442695
  %v35 = vpow.pop %v34
  %v36 = vadd.f32 %v32, %v35
  %v37 = vlog2.pop %v36
  %v38 = vmul.f32 %v37, 0.6931472
  %v39 = vadd.f32 %v21, %v38
  %vm40 = vcmp.eq.s32.totalorder %v11, 0
  %vm41 = vcmp.eq.s32.totalorder %v11, 1
  %vm42 = vcmp.eq.s32.totalorder %v11, 2
  %v43 = vsel %vm42, 0.061164714, 0.024336232
  %v44 = vsel %vm41, 0.203074, %v43
  %v45 = vsel %vm40, 0.65981966, %v44
  %v46 = vmul.f32 %v45, %v12
  %v47 = vadd.f32 %v46, 0.0
  %v48 = vsel %vm42, 0.18374893, 0.073110096
  %v49 = vsel %vm41, 0.5520124, %v48
  %v50 = vsel %vm40, 0.24273407, %v49
  %v51 = vmul.f32 %v50, %v14
  %v52 = vadd.f32 %v47, %v51
  %v53 = vsel %vm42, 0.5520124, 0.24273406
  %v54 = vsel %vm41, 0.18374893, %v53
  %v55 = vsel %vm40, 0.0731101, %v54
  %v56 = vmul.f32 %v55, %v16
  %v57 = vadd.f32 %v52, %v56
  %v58 = vsel %vm42, 0.203074, 0.6598196
  %v59 = vsel %vm41, 0.061164714, %v58
  %v60 = vsel %vm40, 0.024336234, %v59
  %v61 = vmul.f32 %v60, %v18
  %v62 = vadd.f32 %v57, %v61
  %vm63 = vcmp.ge.s32.totalorder %v11, 0
  %v64 = vsub.f32 %v39, %v62
  %v65 = vsel %vm63, %v64, 0.0
  %v66 = vadd.f32 %v65, 0.0
  %v67 = vmul.f32 %v66, 0.125
  %68 = vst [vmem:[%s2] sm:$0x1] %v67
  // Predicated region
  $region10: #{smooth_loss.1} parent=0 // pred_check
    _
  $region11: #{smooth_loss.1} parent=0 // pred_check_branch
    %70 = sbr.rel (0) target = $region13
  $region12: #{smooth_loss.1} parent=0 // pred_region
    _
  $region13: #{smooth_loss.1} parent=0 // pred_fallthru
    _
  // Predicated region
  $region14: #{smooth_loss.1} parent=0 // pred_check
    _
  $region15: #{smooth_loss.1} parent=0 // pred_check_branch
    %72 = sbr.rel (0) target = $region17
  $region16: #{smooth_loss.1} parent=0 // pred_region
    _
  $region17: #{smooth_loss.1} parent=0 // pred_fallthru
    _

</llo_original>
